<compile_context>
chip_gen: v5e
topology: v5e:2x2
jax: 0.10.0
libtpu: 0.0.40
codegen_flags: <defaults>
</compile_context>

<pallas_src>
import functools

import jax
import jax.numpy as jnp
from jax.experimental import pallas as pl
from jax.experimental.pallas import tpu as pltpu

_MIB = 1024 * 1024


def _tpu_profile():
    """Return (per-core VMEM bytes, #TensorCores). Defensive against API drift."""
    vmem = 128 * _MIB
    num_tc = None
    try:
        info = pltpu.get_tpu_info()
        vmem = int(getattr(info, "vmem_capacity_bytes", vmem))
        for attr in ("num_cores", "num_tensorcores", "tensorcore_count", "core_count"):
            val = getattr(info, attr, None)
            if val:
                num_tc = int(val)
                break
    except Exception:
        pass
    if not num_tc:
        # Heuristic: 64 MiB per-TC VMEM ==> v7x-class chip with 2 TCs per chip.
        num_tc = 2 if vmem <= 64 * _MIB else 1
    return vmem, num_tc


def _choose_tiling(B, C, HW, itemsize, budget_bytes, num_tc):
    """Pick (batch block, spatial tile) so a single input block stays under the
    per-generation VMEM budget (auto double-buffering doubles it; bf16 reduces
    may add an f32-sized temp, already reflected in the budget)."""
    per_b_full = C * HW * itemsize
    if per_b_full <= budget_bytes:
        # Whole feature map per block; batch block as big as the budget allows.
        sblk = HW
        bblk = int(max(1, min(B, budget_bytes // per_b_full)))
        if num_tc >= 2 and B >= 2:
            # Keep >= 2 steps on the batch-parallel axis only when there are
            # actually two TensorCores to feed (v7x); on single-TC v5e/v6e
            # larger blocks just mean fewer fixed-overhead grid steps.
            bblk = min(bblk, pl.cdiv(B, 2))
    else:
        # Large feature map: masked cdiv tiling along H*W with the largest
        # 128-multiple tile that fits the budget (never over-budget).
        bblk = 1
        sblk = max(128, (budget_bytes // (C * itemsize)) // 128 * 128)
        sblk = int(min(sblk, pl.cdiv(HW, 128) * 128))
    return bblk, sblk


def _pool_kernel(x_ref, sum_ref, max_ref, sum_acc, max_acc,
                 *, nk_per_split, sblk, hw, needs_mask):
    # x_ref:   (bblk, C, sblk) lane-dense spatial tile (native dtype)
    # sum_ref: (bblk, 1, C) f32 partial spatial sum for this (split, batch) block
    # max_ref: (bblk, 1, C) f32 partial spatial max
    # sum_acc / max_acc: (bblk, C) f32 running accumulators (scratch)
    p = pl.program_id(0)
    k = pl.program_id(2)

    @pl.when(k == 0)
    def _init():
        sum_acc[...] = jnp.zeros_like(sum_acc)
        max_acc[...] = jnp.full_like(max_acc, -jnp.inf)

    x = x_ref[...]                                          # native dtype, no f32 copy
    if needs_mask:
        # Lane mask for the ragged spatial tail / the clamped overshoot tile.
        valid = hw - (p * nk_per_split + k) * sblk          # traced scalar (may be <= 0)
        lane = jax.lax.broadcasted_iota(jnp.int32, (1, 1, sblk), 2)
        in_range = lane < valid
        x_sum = jnp.where(in_range, x, jnp.array(0, x.dtype))
        x_max = jnp.where(in_range, x, jnp.array(-jnp.inf, x.dtype))
    else:
        x_sum = x
        x_max = x

    # f32 accumulation fused into the reduce; max is exact in the native dtype
    # and only the small (bblk, C) result is cast.
    sum_acc[...] += jnp.sum(x_sum, axis=-1, dtype=jnp.float32)
    max_acc[...] = jnp.maximum(max_acc[...],
                               jnp.max(x_max, axis=-1).astype(jnp.float32))

    @pl.when(k == nk_per_split - 1)
    def _emit():
        sum_ref[...] = sum_acc[...][:, None, :]
        max_ref[...] = max_acc[...][:, None, :]


def _finalize_kernel(sum_ref, max_ref, w1t_ref, w2t_ref, o_ref,
                     *, inv_hw, n_batch, row_stride, num_splits):
    # sum_ref/max_ref: (P*nb*bblk, 1, C) f32 partials; w1t: (C, Ch); w2t: (Ch, C)
    s_all = sum_ref[...][:, 0, :]                           # (rows, C)
    m_all = max_ref[...][:, 0, :]
    s = s_all[0:n_batch]
    m = m_all[0:n_batch]
    for p in range(1, num_splits):                          # combine spatial splits
        off = p * row_stride
        s = s + s_all[off:off + n_batch]
        m = jnp.maximum(m, m_all[off:off + n_batch])

    avg = s * inv_hw                                        # (B, C)
    pooled = jnp.concatenate([avg, m], axis=0)              # (2B, C)
    hid = jnp.maximum(
        jnp.dot(pooled, w1t_ref[...], preferred_element_type=jnp.float32), 0.0)
    out = jnp.dot(hid, w2t_ref[...], preferred_element_type=jnp.float32)
    att = jax.nn.sigmoid(out[:n_batch] + out[n_batch:])     # (B, C)
    o_ref[...] = att[:, None, :].astype(o_ref.dtype)


def channel_attention(x, w1, w2, *, _test_block_bytes=None, _test_num_tc=None):
    """x: (B, C, H, W); w1: (C//16, C) fc1 weight; w2: (C, C//16) fc2 weight.
    Returns sigmoid channel attention of shape (B, C, 1, 1) (PyTorch semantics)."""
    B, C, H, W = x.shape
    HW = H * W
    itemsize = x.dtype.itemsize

    vmem_phys, num_tc = _tpu_profile()
    if _test_num_tc is not None:
        num_tc = _test_num_tc
    # Scoped limit: <= half of per-core VMEM, capped at 64 MiB (v7x has 64 MiB/TC).
    vmem_limit = int(min(vmem_phys // 2, 64 * _MIB))
    # Headroom for double-buffered input blocks + reduction temps (more for bf16).
    budget = vmem_limit // (6 if itemsize >= 4 else 8)
    if _test_block_bytes is not None:
        budget = _test_block_bytes

    bblk, sblk = _choose_tiling(B, C, HW, itemsize, budget, num_tc)
    nb = pl.cdiv(B, bblk)
    nk_total = pl.cdiv(HW, sblk)
    # Feed both v7x TensorCores even when the batch axis has a single step by
    # splitting the spatial reduction in two and combining in kernel 2.
    P = num_tc if (num_tc >= 2 and nb < 2 and nk_total >= 2) else 1
    nk_per_split = pl.cdiv(nk_total, P)
    needs_mask = (HW % sblk != 0) or (P * nk_per_split != nk_total)

    # Lane-dense layout: H*W on the 128-wide lane axis (free reshape).
    x2 = x.reshape(B, C, HW)
    w1t = jnp.transpose(w1).astype(jnp.float32)             # (C, Ch)
    w2t = jnp.transpose(w2).astype(jnp.float32)             # (Ch, C)

    def x_index_map(p, b, k):
        # Clamp so an overshooting last tile of a spatial split re-reads a valid
        # block; its contribution is fully masked out in-kernel.
        s = jnp.minimum(p * nk_per_split + k, nk_total - 1)
        return (b, 0, s)

    def out_index_map(p, b, k):
        return (p * nb + b, 0, 0)

    rows = P * nb * bblk
    pool_kernel = functools.partial(
        _pool_kernel, nk_per_split=nk_per_split, sblk=sblk, hw=HW,
        needs_mask=needs_mask)

    sum_part, max_part = pl.pallas_call(
        pool_kernel,
        out_shape=(
            jax.ShapeDtypeStruct((rows, 1, C), jnp.float32),
            jax.ShapeDtypeStruct((rows, 1, C), jnp.float32),
        ),
        grid_spec=pltpu.PrefetchScalarGridSpec(
            num_scalar_prefetch=0,
            grid=(P, nb, nk_per_split),
            in_specs=[pl.BlockSpec((bblk, C, sblk), x_index_map)],
            out_specs=[
                pl.BlockSpec((bblk, 1, C), out_index_map),
                pl.BlockSpec((bblk, 1, C), out_index_map),
            ],
            scratch_shapes=[
                pltpu.VMEM((bblk, C), jnp.float32),   # running spatial sum
                pltpu.VMEM((bblk, C), jnp.float32),   # running spatial max
            ],
        ),
        compiler_params=pltpu.CompilerParams(
            dimension_semantics=("parallel", "parallel", "arbitrary"),
            vmem_limit_bytes=vmem_limit,
        ),
        cost_estimate=pl.CostEstimate(
            flops=2 * B * C * HW,                 # streaming sum + max
            transcendentals=0,
            bytes_accessed=B * C * HW * itemsize + 2 * rows * C * 4,
        ),
    )(x2)

    fin_kernel = functools.partial(
        _finalize_kernel, inv_hw=1.0 / HW, n_batch=B,
        row_stride=nb * bblk, num_splits=P)

    att = pl.pallas_call(
        fin_kernel,
        out_shape=jax.ShapeDtypeStruct((B, 1, C), x.dtype),
    )(sum_part, max_part, w1t, w2t)

    return att.reshape(B, C, 1, 1)


def _reference(x, w1, w2):
    xf = x.astype(jnp.float32)
    avg = jnp.mean(xf, axis=(2, 3))
    mx = jnp.max(xf, axis=(2, 3))
    fc = lambda v: jnp.maximum(v @ w1.T, 0.0) @ w2.T
    out = jax.nn.sigmoid(fc(avg) + fc(mx))
    return out.reshape(x.shape[0], x.shape[1], 1, 1)


if __name__ == "__main__":
    key = jax.random.PRNGKey(0)
    kx, k1, k2, kb = jax.random.split(key, 4)

    # in_planes must be >= 16 since the module hard-codes in_planes // 16.
    B, C, H, W = 2, 32, 16, 16
    Ch = C // 16
    x = jax.random.normal(kx, (B, C, H, W), dtype=jnp.float32)
    # Conv2d 1x1, no bias -> plain 2D matrices (weight[:, :, 0, 0]).
    w1 = jax.random.normal(k1, (Ch, C), dtype=jnp.float32) * 0.1
    w2 = jax.random.normal(k2, (C, Ch), dtype=jnp.float32) * 0.1

    # 1) Main f32 path (whole feature map per block).
    out = jax.block_until_ready(channel_attention(x, w1, w2))
    ref = _reference(x, w1, w2)
    assert out.shape == (B, C, 1, 1)
    assert jnp.allclose(out, ref, atol=1e-5, rtol=1e-5), "main f32 path mismatch"

    # 2) Ragged H*W + forced spatial tiling + two-way split (exercises the
    #    masked cdiv path and the v7x-style split/combine on any chip).
    x_r = jax.random.normal(kb, (1, C, 9, 29), dtype=jnp.float32)   # H*W = 261
    out_r = jax.block_until_ready(
        channel_attention(x_r, w1, w2,
                          _test_block_bytes=C * 128 * 4, _test_num_tc=2))
    ref_r = _reference(x_r, w1, w2)
    assert jnp.allclose(out_r, ref_r, atol=1e-5, rtol=1e-5), "masked/split path mismatch"

    # 3) bf16 input path (no full f32 tile materialization in-kernel).
    x_b = x.astype(jnp.bfloat16)
    out_b = jax.block_until_ready(channel_attention(x_b, w1, w2))
    ref_b = _reference(x_b, w1, w2)
    assert out_b.dtype == jnp.bfloat16
    assert jnp.allclose(out_b.astype(jnp.float32), ref_b, atol=2e-2), "bf16 path mismatch"

    print("KERNEL_OK")
</pallas_src>

<mosaic_0001>
module attributes {stable_mosaic.version = 11 : i64} {
  func.func @_pool_kernel(%arg0: i32, %arg1: i32, %arg2: i32, %arg3: memref<2x32x256xf32, #tpu.memory_space<vmem>>, %arg4: memref<2x1x32xf32, #tpu.memory_space<vmem>>, %arg5: memref<2x1x32xf32, #tpu.memory_space<vmem>>, %arg6: memref<2x32xf32, #tpu.memory_space<vmem>>, %arg7: memref<2x32xf32, #tpu.memory_space<vmem>>) attributes {dimension_semantics = [#tpu.dimension_semantics<parallel>, #tpu.dimension_semantics<parallel>, #tpu.dimension_semantics<arbitrary>], iteration_bounds = array<i64: 1, 1, 1>, scalar_prefetch = 0 : i64, scratch_operands = 2 : i64, tpu.core_type = #tpu.core_type<tc>, window_params = [{transform_indices = @transform_0, window_bounds = array<i64: 2, 32, 256>}, {transform_indices = @transform_1, window_bounds = array<i64: 2, 1, 32>}, {transform_indices = @transform_2, window_bounds = array<i64: 2, 1, 32>}]} {
    %c0_i32 = arith.constant 0 : i32
    %0 = arith.cmpi eq, %arg2, %c0_i32 : i32
    %1 = arith.extui %0 : i1 to i32
    %c0_i32_0 = arith.constant 0 : i32
    %2 = arith.cmpi ne, %1, %c0_i32_0 : i32
    scf.if %2 {
      %cst_14 = arith.constant 0.000000e+00 : f32
      %15 = vector.broadcast %cst_14 : f32 to vector<2x32xf32>
      %c0_15 = arith.constant 0 : index
      %c0_16 = arith.constant 0 : index
      %16 = vector.load %arg6[%c0_15, %c0_16] : memref<2x32xf32, #tpu.memory_space<vmem>>, vector<2x32xf32>
      tpu.vector_store %arg6[%c0_15, %c0_16], %15 {strides = array<i32>} : memref<2x32xf32, #tpu.memory_space<vmem>>, vector<2x32xf32>,
      %cst_17 = arith.constant 0xFF800000 : f32
      %17 = vector.broadcast %cst_17 : f32 to vector<2x32xf32>
      %c0_18 = arith.constant 0 : index
      %c0_19 = arith.constant 0 : index
      %18 = vector.load %arg7[%c0_18, %c0_19] : memref<2x32xf32, #tpu.memory_space<vmem>>, vector<2x32xf32>
      tpu.vector_store %arg7[%c0_18, %c0_19], %17 {strides = array<i32>} : memref<2x32xf32, #tpu.memory_space<vmem>>, vector<2x32xf32>,
    } else {
    }
    %c0 = arith.constant 0 : index
    %c0_1 = arith.constant 0 : index
    %c0_2 = arith.constant 0 : index
    %3 = vector.load %arg3[%c0, %c0_1, %c0_2] : memref<2x32x256xf32, #tpu.memory_space<vmem>>, vector<2x32x256xf32>
    %c0_3 = arith.constant 0 : index
    %c0_4 = arith.constant 0 : index
    %4 = vector.load %arg6[%c0_3, %c0_4] : memref<2x32xf32, #tpu.memory_space<vmem>>, vector<2x32xf32>
    %cst = arith.constant dense<0.000000e+00> : vector<2x32xf32>
    %5 = vector.multi_reduction <add>, %3, %cst [2] : vector<2x32x256xf32> to vector<2x32xf32>
    %6 = arith.addf %4, %5 : vector<2x32xf32>
    %c0_5 = arith.constant 0 : index
    %c0_6 = arith.constant 0 : index
    %7 = vector.load %arg6[%c0_5, %c0_6] : memref<2x32xf32, #tpu.memory_space<vmem>>, vector<2x32xf32>
    tpu.vector_store %arg6[%c0_5, %c0_6], %6 {strides = array<i32>} : memref<2x32xf32, #tpu.memory_space<vmem>>, vector<2x32xf32>,
    %c0_7 = arith.constant 0 : index
    %c0_8 = arith.constant 0 : index
    %8 = vector.load %arg7[%c0_7, %c0_8] : memref<2x32xf32, #tpu.memory_space<vmem>>, vector<2x32xf32>
    %cst_9 = arith.constant dense<0xFF800000> : vector<2x32xf32>
    %9 = vector.multi_reduction <maximumf>, %3, %cst_9 [2] : vector<2x32x256xf32> to vector<2x32xf32>
    %10 = arith.maximumf %8, %9 : vector<2x32xf32>
    %c0_10 = arith.constant 0 : index
    %c0_11 = arith.constant 0 : index
    %11 = vector.load %arg7[%c0_10, %c0_11] : memref<2x32xf32, #tpu.memory_space<vmem>>, vector<2x32xf32>
    tpu.vector_store %arg7[%c0_10, %c0_11], %10 {strides = array<i32>} : memref<2x32xf32, #tpu.memory_space<vmem>>, vector<2x32xf32>,
    %c0_i32_12 = arith.constant 0 : i32
    %12 = arith.cmpi eq, %arg2, %c0_i32_12 : i32
    %13 = arith.extui %12 : i1 to i32
    %c0_i32_13 = arith.constant 0 : i32
    %14 = arith.cmpi ne, %13, %c0_i32_13 : i32
    scf.if %14 {
      %c0_14 = arith.constant 0 : index
      %c0_15 = arith.constant 0 : index
      %15 = vector.load %arg6[%c0_14, %c0_15] : memref<2x32xf32, #tpu.memory_space<vmem>>, vector<2x32xf32>
      %16 = vector.shape_cast %15 : vector<2x32xf32> to vector<2x1x32xf32>
      %c0_16 = arith.constant 0 : index
      %c0_17 = arith.constant 0 : index
      %c0_18 = arith.constant 0 : index
      %17 = vector.load %arg4[%c0_16, %c0_17, %c0_18] : memref<2x1x32xf32, #tpu.memory_space<vmem>>, vector<2x1x32xf32>
      tpu.vector_store %arg4[%c0_16, %c0_17, %c0_18], %16 {strides = array<i32>} : memref<2x1x32xf32, #tpu.memory_space<vmem>>, vector<2x1x32xf32>,
      %c0_19 = arith.constant 0 : index
      %c0_20 = arith.constant 0 : index
      %18 = vector.load %arg7[%c0_19, %c0_20] : memref<2x32xf32, #tpu.memory_space<vmem>>, vector<2x32xf32>
      %19 = vector.shape_cast %18 : vector<2x32xf32> to vector<2x1x32xf32>
      %c0_21 = arith.constant 0 : index
      %c0_22 = arith.constant 0 : index
      %c0_23 = arith.constant 0 : index
      %20 = vector.load %arg5[%c0_21, %c0_22, %c0_23] : memref<2x1x32xf32, #tpu.memory_space<vmem>>, vector<2x1x32xf32>
      tpu.vector_store %arg5[%c0_21, %c0_22, %c0_23], %19 {strides = array<i32>} : memref<2x1x32xf32, #tpu.memory_space<vmem>>, vector<2x1x32xf32>,
    } else {
    }
    return
  }
  func.func @transform_0(%arg0: i32, %arg1: i32, %arg2: i32) -> (i32, i32, i32) {
    %c1_i32 = arith.constant 1 : i32
    %0 = arith.muli %arg0, %c1_i32 : i32
    %1 = arith.addi %0, %arg2 : i32
    %c0_i32 = arith.constant 0 : i32
    %2 = arith.minsi %1, %c0_i32 : i32
    %c0_i32_0 = arith.constant 0 : i32
    %c0_i32_1 = arith.constant 0 : i32
    return %arg1, %c0_i32_0, %2 : i32, i32, i32
  }
  func.func @transform_1(%arg0: i32, %arg1: i32, %arg2: i32) -> (i32, i32, i32) {
    %c1_i32 = arith.constant 1 : i32
    %0 = arith.muli %arg0, %c1_i32 : i32
    %1 = arith.addi %0, %arg1 : i32
    %c0_i32 = arith.constant 0 : i32
    %c0_i32_0 = arith.constant 0 : i32
    %c0_i32_1 = arith.constant 0 : i32
    return %1, %c0_i32, %c0_i32_0 : i32, i32, i32
  }
  func.func @transform_2(%arg0: i32, %arg1: i32, %arg2: i32) -> (i32, i32, i32) {
    %c1_i32 = arith.constant 1 : i32
    %0 = arith.muli %arg0, %c1_i32 : i32
    %1 = arith.addi %0, %arg1 : i32
    %c0_i32 = arith.constant 0 : i32
    %c0_i32_0 = arith.constant 0 : i32
    %c0_i32_1 = arith.constant 0 : i32
    return %1, %c0_i32, %c0_i32_0 : i32, i32, i32
  }
}

</mosaic_0001>

<llo_original>
// kernel: tpu_custom_call.1
$region0: #{tpu_custom_call.1}
  #allocation0 [shape = 'u32[]', space=smem, size = 0x4, offset = 0x4, fixed_abs, tag = 'smem constant byte address 0x4 - core index']
  #allocation1 [shape = 'u32[72,128]{1,0:T(1,128)}', space=vmem, size = 0x9000, scoped, tag = 'internal scratch']
  #allocation2 [shape = 'f32[2,32]{1,0:T(2,128)}', space=vmem, size = 0x400, scoped, tag = 'scratch operand']
  #allocation3 [shape = 'f32[2,32]{1,0:T(2,128)}', space=vmem, size = 0x400, scoped, tag = 'scratch operand']
  %s0 = inlined_call_operand.hbm [shape: f32[2,32,256], index: 0, kind: input, shape index: {}]
  %s1 = inlined_call_operand.hbm [shape: f32[2,1,32], index: 1, kind: output, shape index: {0}]
  %s2 = inlined_call_operand.hbm [shape: f32[2,1,32], index: 2, kind: output, shape index: {1}]
  %3 = xla_tuple %s1, %s2
  %s4 = sld [smem:[#allocation0]]
  $region34: #{tpu_custom_call.1} parent=0
    _
  %s6 = ssub.s32 1, %s4
  %s7 = scalar_select 0, %s6, %s4
  $region1: #{tpu_custom_call.1} parent=0
    #allocation4 [shape = 'u8[65536]{0}', space=vmem, size = 0x10000, scoped, tag = 'input window, operand 0, single buffered']
    #allocation5 [shape = 's32[1]{0}', space=sflag, size = 0x4, scoped, tag = 'scoped memory for tpu_custom_call.1']
    #allocation6 [shape = 's32[1]{0}', space=sflag, size = 0x4, scoped, tag = 'scoped memory for tpu_custom_call.1']
    #allocation7 [shape = 'u8[1024]{0}', space=vmem, size = 0x400, scoped, tag = 'output window, operand 0, single buffered']
    #allocation8 [shape = 'u8[1024]{0}', space=vmem, size = 0x400, scoped, tag = 'output window, operand 1, single buffered']
    #allocation9 [shape = 's32[1]{0}', space=sflag, size = 0x4, scoped, tag = 'scoped memory for tpu_custom_call.1']
    %8 = vsyncpa [#allocation5], 0
    %9 = vsyncpa [#allocation6], 0
    %10 = vsyncpa [#allocation9], 0
    // Predicated region
    $region2: #{tpu_custom_call.1} parent=1 // pred_check
      _
    $region3: #{tpu_custom_call.1} parent=1 // pred_check_branch
      %12 = sbr.rel (0) target = $region5
    $region4: #{tpu_custom_call.1} parent=1 // pred_region
      %s13 = sadd.s32 0, 0
      %p14 = scmp.lt.s32.totalorder %s13, 0
      %s15 = scalar_select %p14, %s13, 0
      %s16 = smul.u32 2, %s15
      %18 = vsyncadd [#allocation5], 0
      %s19 = smul.addr %s16, 8
      %s20 = scalar_lea.hbm %s0, %s19
      %s21 = sshll.u32 %s20, 4
      %s22 = int_to_ptr.hbm [resolvable:$true] %s21
      %s23 = sshll.u32 [#allocation4], 4
      %s24 = int_to_ptr.vmem [resolvable:$true] %s23
      %29 = dma.hbm_to_vmem [thread:$0]  %s22, 2048, %s24, [#allocation5], 256, 256, 16
    $region5: #{tpu_custom_call.1} parent=1 // pred_fallthru
      _
    // Predicated region
    $region6: #{tpu_custom_call.1} parent=1 // pred_check
      _
    $region7: #{tpu_custom_call.1} parent=1 // pred_check_branch
      %31 = sbr.rel (0) target = $region9
    $region8: #{tpu_custom_call.1} parent=1 // pred_region
      %33 = dma.done [#allocation5], 2048
    $region9: #{tpu_custom_call.1} parent=1 // pred_fallthru
      _
    %s34 = sadd.s32 0, 0
    %p35 = scmp.lt.s32.totalorder %s34, 0
    %s36 = scalar_select %p35, %s34, 0
    %s37 = smul.u32 2, %s36
    %s38 = sadd.s32 0, 0
    %s39 = smul.u32 2, %s38
    %s40 = sadd.s32 0, 0
    %s41 = smul.u32 2, %s40
    %p42 = scmp.eq.s32.totalorder 0, 0
    // Predicated region
    $region10: #{tpu_custom_call.1} parent=1 // pred_check
      %p43 = pneg %p42
    $region11: #{tpu_custom_call.1} parent=1 // pred_check_branch
      %45 = sbr.rel (%p43) target = $region13
    $region12: #{tpu_custom_call.1} parent=1 // pred_region
      %vm46 = vcmask 254976
      %47 = vst.msk [vmem:[#allocation2] sm:$0x3] %vm46, 0.0
      %48 = vst.msk [vmem:[#allocation3] sm:$0x3] %vm46, -inf
    $region13: #{tpu_custom_call.1} parent=1 // pred_fallthru
      _
    %v49 = vld [vmem:[#allocation4] sm:$0xff]
    %v50 = vld [vmem:[#allocation4 + $0x8] sm:$0xff]
    %v51 = vld [vmem:[#allocation4 + $0x10] sm:$0xff]
    %v52 = vld [vmem:[#allocation4 + $0x18] sm:$0xff]
    %v53 = vld [vmem:[#allocation4 + $0x20] sm:$0xff]
    %v54 = vld [vmem:[#allocation4 + $0x28] sm:$0xff]
    %v55 = vld [vmem:[#allocation4 + $0x30] sm:$0xff]
    %v56 = vld [vmem:[#allocation4 + $0x38] sm:$0xff]
    %v57 = vld [vmem:[#allocation4 + $0x40] sm:$0xff]
    %v58 = vld [vmem:[#allocation4 + $0x48] sm:$0xff]
    %v59 = vld [vmem:[#allocation4 + $0x50] sm:$0xff]
    %v60 = vld [vmem:[#allocation4 + $0x58] sm:$0xff]
    %v61 = vld [vmem:[#allocation4 + $0x60] sm:$0xff]
    %v62 = vld [vmem:[#allocation4 + $0x68] sm:$0xff]
    %v63 = vld [vmem:[#allocation4 + $0x70] sm:$0xff]
    %v64 = vld [vmem:[#allocation4 + $0x78] sm:$0xff]
    %v65 = vld [vmem:[#allocation2] sm:$0x3]
    %v66 = vadd.f32 %v49, %v50
    %67 = vadd.xlane.f32.xlu0 %v66
    %v68 = vpop.xlane.xlu0 %67
    %v69 = vadd.f32 %v51, %v52
    %70 = vadd.xlane.f32.xlu0 %v69
    %v71 = vpop.xlane.xlu0 %70
    %v72 = vadd.f32 %v53, %v54
    %73 = vadd.xlane.f32.xlu0 %v72
    %v74 = vpop.xlane.xlu0 %73
    %v75 = vadd.f32 %v55, %v56
    %76 = vadd.xlane.f32.xlu0 %v75
    %v77 = vpop.xlane.xlu0 %76
    %v78 = vadd.f32 %v57, %v58
    %79 = vadd.xlane.f32.xlu0 %v78
    %v80 = vpop.xlane.xlu0 %79
    %v81 = vadd.f32 %v59, %v60
    %82 = vadd.xlane.f32.xlu0 %v81
    %v83 = vpop.xlane.xlu0 %82
    %v84 = vadd.f32 %v61, %v62
    %85 = vadd.xlane.f32.xlu0 %v84
    %v86 = vpop.xlane.xlu0 %85
    %v87 = vadd.f32 %v63, %v64
    %88 = vadd.xlane.f32.xlu0 %v87
    %v89 = vpop.xlane.xlu0 %88
    %v98 = vlaneseq
    %v99 = vand.u32 %v98, 127
    %v100 = vperm.slane %v68, %v99
    %v101 = vadd.s32 %v99, 4294967288
    %v102 = vperm.slane %v71, %v101
    %vm103 = vcmask 130112
    %v104 = vsel %vm103, %v102, %v100
    %v105 = vadd.s32 %v99, 4294967280
    %v106 = vperm.slane %v74, %v105
    %vm107 = vcmask 195712
    %v108 = vsel %vm107, %v106, %v104
    %v109 = vadd.s32 %v99, 4294967272
    %v110 = vperm.slane %v77, %v109
    %vm111 = vcmask 261312
    %v112 = vsel %vm111, %v110, %v108
    %v113 = vperm.slane %v80, %v99
    %v114 = vperm.slane %v83, %v101
    %v115 = vsel %vm103, %v114, %v113
    %v116 = vperm.slane %v86, %v105
    %v117 = vsel %vm107, %v116, %v115
    %v118 = vperm.slane %v89, %v109
    %v119 = vsel %vm111, %v118, %v117
    %vm120 = vcmask 1041409
    %v121 = vsel %vm120, %v119, %v112
    %v123 = vadd.f32 %v65, %v121
    %vm124 = vcmask 254976
    %125 = vst.msk [vmem:[#allocation2] sm:$0x3] %vm124, %v123
    %v126 = vld [vmem:[#allocation3] sm:$0x3]
    %v127 = vmax.f32 %v49, %v50
    %128 = vmax.xlane.f32.xlu0 %v127
    %v129 = vpop.xlane.xlu0 %128
    %v130 = vmax.f32 %v51, %v52
    %131 = vmax.xlane.f32.xlu0 %v130
    %v132 = vpop.xlane.xlu0 %131
    %v133 = vmax.f32 %v53, %v54
    %134 = vmax.xlane.f32.xlu0 %v133
    %v135 = vpop.xlane.xlu0 %134
    %v136 = vmax.f32 %v55, %v56
    %137 = vmax.xlane.f32.xlu0 %v136
    %v138 = vpop.xlane.xlu0 %137
    %v139 = vmax.f32 %v57, %v58
    %140 = vmax.xlane.f32.xlu0 %v139
    %v141 = vpop.xlane.xlu0 %140
    %v142 = vmax.f32 %v59, %v60
    %143 = vmax.xlane.f32.xlu0 %v142
    %v144 = vpop.xlane.xlu0 %143
    %v145 = vmax.f32 %v61, %v62
    %146 = vmax.xlane.f32.xlu0 %v145
    %v147 = vpop.xlane.xlu0 %146
    %v148 = vmax.f32 %v63, %v64
    %149 = vmax.xlane.f32.xlu0 %v148
    %v150 = vpop.xlane.xlu0 %149
    %v159 = vperm.slane %v129, %v99
    %v160 = vperm.slane %v132, %v101
    %v161 = vsel %vm103, %v160, %v159
    %v162 = vperm.slane %v135, %v105
    %v163 = vsel %vm107, %v162, %v161
    %v164 = vperm.slane %v138, %v109
    %v165 = vsel %vm111, %v164, %v163
    %v166 = vperm.slane %v141, %v99
    %v167 = vperm.slane %v144, %v101
    %v168 = vsel %vm103, %v167, %v166
    %v169 = vperm.slane %v147, %v105
    %v170 = vsel %vm107, %v169, %v168
    %v171 = vperm.slane %v150, %v109
    %v172 = vsel %vm111, %v171, %v170
    %v173 = vsel %vm120, %v172, %v165
    %v175 = vmax.f32 %v126, %v173
    %176 = vst.msk [vmem:[#allocation3] sm:$0x3] %vm124, %v175
    // Predicated region
    $region14: #{tpu_custom_call.1} parent=1 // pred_check
      %p177 = pneg %p42
    $region15: #{tpu_custom_call.1} parent=1 // pred_check_branch
      %179 = sbr.rel (%p177) target = $region17
    $region16: #{tpu_custom_call.1} parent=1 // pred_region
      %v180 = vld [vmem:[#allocation2] sm:$0x3]
      %v182 = vrot.slane %v180, 1
      %vm184 = vcmask 253952
      %185 = vst.msk [vmem:[#allocation7] sm:$0x1] %vm184, %v180
      %186 = vst.msk [vmem:[#allocation7 + $0x1] sm:$0x1] %vm184, %v182
      %v187 = vld [vmem:[#allocation3] sm:$0x3]
      %v189 = vrot.slane %v187, 1
      %191 = vst.msk [vmem:[#allocation8] sm:$0x1] %vm184, %v187
      %192 = vst.msk [vmem:[#allocation8 + $0x1] sm:$0x1] %vm184, %v189
    $region17: #{tpu_custom_call.1} parent=1 // pred_fallthru
      _
    // Predicated region
    $region18: #{tpu_custom_call.1} parent=1 // pred_check
      _
    $region19: #{tpu_custom_call.1} parent=1 // pred_check_branch
      %194 = sbr.rel (0) target = $region21
    $region20: #{tpu_custom_call.1} parent=1 // pred_region
      %s195 = sadd.s32 0, 0
      %s196 = smul.u32 2, %s195
      %198 = vsyncadd [#allocation6], 0
      %s199 = scalar_lea.hbm %s1, %s196
      %s200 = sshll.u32 [#allocation7], 4
      %s201 = int_to_ptr.vmem [resolvable:$true] %s200
      %s202 = sshll.u32 %s199, 4
      %s203 = int_to_ptr.hbm [resolvable:$true] %s202
      %208 = dma.vmem_to_hbm [thread:$0]  %s201, 32, %s203, [#allocation6], 16, 16, 1
    $region21: #{tpu_custom_call.1} parent=1 // pred_fallthru
      _
    // Predicated region
    $region22: #{tpu_custom_call.1} parent=1 // pred_check
      _
    $region23: #{tpu_custom_call.1} parent=1 // pred_check_branch
      %210 = sbr.rel (0) target = $region25
    $region24: #{tpu_custom_call.1} parent=1 // pred_region
      %s211 = sadd.s32 0, 0
      %s212 = smul.u32 2, %s211
      %214 = vsyncadd [#allocation9], 0
      %s215 = scalar_lea.hbm %s2, %s212
      %s216 = sshll.u32 [#allocation8], 4
      %s217 = int_to_ptr.vmem [resolvable:$true] %s216
      %s218 = sshll.u32 %s215, 4
      %s219 = int_to_ptr.hbm [resolvable:$true] %s218
      %224 = dma.vmem_to_hbm [thread:$0]  %s217, 32, %s219, [#allocation9], 16, 16, 1
    $region25: #{tpu_custom_call.1} parent=1 // pred_fallthru
      _
    // Predicated region
    $region26: #{tpu_custom_call.1} parent=1 // pred_check
      _
    $region27: #{tpu_custom_call.1} parent=1 // pred_check_branch
      %226 = sbr.rel (0) target = $region29
    $region28: #{tpu_custom_call.1} parent=1 // pred_region
      %228 = dma.done [#allocation6], 32
    $region29: #{tpu_custom_call.1} parent=1 // pred_fallthru
      _
    // Predicated region
    $region30: #{tpu_custom_call.1} parent=1 // pred_check
      _
    $region31: #{tpu_custom_call.1} parent=1 // pred_check_branch
      %230 = sbr.rel (0) target = $region33
    $region32: #{tpu_custom_call.1} parent=1 // pred_region
      %232 = dma.done [#allocation9], 32
    $region33: #{tpu_custom_call.1} parent=1 // pred_fallthru
      _
    %233 = vsyncpa [#allocation5], 1
    %234 = vsyncpa [#allocation6], 1
    %235 = vsyncpa [#allocation9], 1

</llo_original>
